<compile_context>
chip_gen: v7x
topology: tpu7x:2x2x1
jax: 0.10.0
libtpu: 0.0.40
codegen_flags: <defaults>
</compile_context>

<pallas_src>
import jax
import jax.numpy as jnp
from jax.experimental import pallas as pl
from jax.experimental.pallas import tpu as pltpu

_LANE = 128
_TM_MAX = 512      # batch-tile upper bound (amortizes per-step overhead)
_TK_MAX = 1024     # K-streaming tile over the input-feature dim


def _round_up(n, m):
    return ((n + m - 1) // m) * m


def _pad2d(x, rows, cols):
    r, c = x.shape
    if r == rows and c == cols:
        return x
    return jnp.pad(x, ((0, rows - r), (0, cols - c)))


def _classifier_kernel(x_ref, w1_ref, b1_ref, w2_ref, b2_ref, wc_ref, bc_ref,
                       out_ref, acc_ref):
    k = pl.program_id(1)

    @pl.when(k == 0)
    def _():
        acc_ref[...] = jnp.zeros_like(acc_ref)

    # ---- encoder GEMM 1, K-streamed: acc += x[:, k_tile] @ w1[k_tile, :] ----
    # f32 pixels cast to bf16 in-kernel; f32 accumulation on the MXU.
    x = x_ref[...].astype(jnp.bfloat16)                               # [TM, TK]
    acc_ref[...] += jnp.dot(x, w1_ref[...],
                            preferred_element_type=jnp.float32)       # [TM, HID]

    @pl.when(k == pl.num_programs(1) - 1)
    def _():
        # ---- encoder: bias + GELU + GEMM 2 (all elementwise math in f32) ----
        h = acc_ref[...] + b1_ref[...]
        h = jax.nn.gelu(h, approximate=True)
        feat = jnp.dot(h.astype(jnp.bfloat16), w2_ref[...],
                       preferred_element_type=jnp.float32) + b2_ref[...]

        # ---- head: L2-normalize == torch F.normalize(eps=1e-12) ----
        sq = jnp.sum(feat * feat, axis=-1, keepdims=True)             # [TM, 1]
        inv_norm = jax.lax.rsqrt(jnp.maximum(sq, 1e-24))              # 1/max(||f||,eps)
        feat_n = (feat * inv_norm).astype(jnp.bfloat16)

        # ---- head Linear ----
        out_ref[...] = (jnp.dot(feat_n, wc_ref[...],
                                preferred_element_type=jnp.float32)
                        + bc_ref[...]).astype(out_ref.dtype)          # [TM, NCLS]


@jax.jit
def image_classifier_forward(x_nchw, params):
    """x_nchw: [B, C, H, W] float32. Returns logits [B, NCLS] float32."""
    B = x_nchw.shape[0]
    x_flat = x_nchw.reshape(B, -1)                                    # glue only
    F = x_flat.shape[1]

    w1, b1, w2, b2, wc, bc = (params["w1"], params["b1"], params["w2"],
                              params["b2"], params["wc"], params["bc"])
    HID, EMB, NCLS = w1.shape[1], w2.shape[1], wc.shape[1]

    # ---- lane-pad feature dims (unmasked vector stores, full MXU columns) ----
    HIDp, EMBp, NCLSp = (_round_up(d, _LANE) for d in (HID, EMB, NCLS))
    Fp = _round_up(F, _LANE)

    # ---- K tile: largest 128-multiple divisor of Fp that is <= _TK_MAX ----
    if Fp <= _TK_MAX:
        TK = Fp
    else:
        TK = _LANE
        for cand in range(_TK_MAX, _LANE - 1, -_LANE):
            if Fp % cand == 0:
                TK = cand
                break
    n_k = Fp // TK

    # ---- batch tile: large, but >=2 tiles when B > 8 (v7x: 2 TCs split it) ----
    if B <= 8:
        TM = _round_up(B, 8)
    else:
        TM = min(_TM_MAX, _round_up(pl.cdiv(B, 2), 8))

    # ---- generation-aware VMEM ceiling (v7x 64 MiB/TC vs 128 MiB v5e/v6e) ----
    try:
        vmem_cap = int(pltpu.get_tpu_info().vmem_capacity_bytes)
    except Exception:                                # conservative fallback
        vmem_cap = 64 << 20
    vmem_ceiling = max(16 << 20, min(vmem_cap - (8 << 20), 100 << 20))

    def vmem_needed(tm):
        return (2 * tm * TK * 4                              # x tiles (f32, 2 bufs)
                + 2 * TK * HIDp * 2                          # w1 K-tiles (bf16, 2 bufs)
                + 2 * (HIDp * EMBp + EMBp * NCLSp) * 2       # w2/wc (2 bufs each)
                + 2 * (HIDp + EMBp + NCLSp) * 4              # biases (2 bufs each)
                + 2 * tm * NCLSp * 4                         # out tiles (f32, 2 bufs)
                + tm * HIDp * 4)                             # accumulator scratch

    while vmem_needed(TM) > vmem_ceiling and TM > 8:
        TM = max(8, TM // 2)

    Bp = _round_up(B, TM)
    n_tiles = Bp // TM
    vmem_limit = int(min(vmem_ceiling, max(vmem_needed(TM) + (8 << 20), 16 << 20)))

    # ---- operand prep: zero-pad (single fused pad, only if needed); x stays f32
    xp = _pad2d(x_flat, Bp, Fp)
    w1p = _pad2d(w1, Fp, HIDp).astype(jnp.bfloat16)
    w2p = _pad2d(w2, HIDp, EMBp).astype(jnp.bfloat16)
    wcp = _pad2d(wc, EMBp, NCLSp).astype(jnp.bfloat16)
    b1p = _pad2d(b1, 1, HIDp).astype(jnp.float32)
    b2p = _pad2d(b2, 1, EMBp).astype(jnp.float32)
    bcp = _pad2d(bc, 1, NCLSp).astype(jnp.float32)

    cost = pl.CostEstimate(
        flops=2 * Bp * (Fp * HIDp + HIDp * EMBp + EMBp * NCLSp),
        transcendentals=Bp * (HIDp + 1),                     # GELU + rsqrt
        bytes_accessed=(xp.size * 4
                        + (Fp * HIDp + HIDp * EMBp + EMBp * NCLSp) * 2
                        + (HIDp + EMBp + NCLSp) * 4
                        + Bp * NCLSp * 4),
    )

    invariant = lambda shp: pl.BlockSpec(shp, lambda i, k: (0, 0))
    out_padded = pl.pallas_call(
        _classifier_kernel,
        out_shape=jax.ShapeDtypeStruct((Bp, NCLSp), jnp.float32),
        grid=(n_tiles, n_k),
        in_specs=[
            pl.BlockSpec((TM, TK), lambda i, k: (i, k)),     # x: batch x K tile
            pl.BlockSpec((TK, HIDp), lambda i, k: (k, 0)),   # w1: K-streamed
            invariant((1, HIDp)),                            # b1
            invariant((HIDp, EMBp)),                         # w2 (VMEM-resident)
            invariant((1, EMBp)),                            # b2
            invariant((EMBp, NCLSp)),                        # wc (VMEM-resident)
            invariant((1, NCLSp)),                           # bc
        ],
        out_specs=pl.BlockSpec((TM, NCLSp), lambda i, k: (i, 0)),
        scratch_shapes=[pltpu.VMEM((TM, HIDp), jnp.float32)],
        compiler_params=pltpu.CompilerParams(
            dimension_semantics=("parallel", "arbitrary"),   # batch || , K reduce
            vmem_limit_bytes=vmem_limit,
        ),
        cost_estimate=cost,
    )(xp, w1p, b1p, w2p, b2p, wcp, bcp)

    return out_padded[:B, :NCLS]


def init_params(key, in_features, hidden, embed, num_classes):
    """Deterministic synthetic weights (kernel expects [in, out] layout)."""
    k1, k2, k3, k4, k5, k6 = jax.random.split(key, 6)
    scale = lambda fan_in: 1.0 / jnp.sqrt(jnp.float32(fan_in))
    return {
        "w1": jax.random.normal(k1, (in_features, hidden), jnp.float32) * scale(in_features),
        "b1": jax.random.normal(k2, (1, hidden), jnp.float32) * 0.01,
        "w2": jax.random.normal(k3, (hidden, embed), jnp.float32) * scale(hidden),
        "b2": jax.random.normal(k4, (1, embed), jnp.float32) * 0.01,
        "wc": jax.random.normal(k5, (embed, num_classes), jnp.float32) * scale(embed),
        "bc": jax.random.normal(k6, (1, num_classes), jnp.float32) * 0.01,
    }


def _reference_forward(x_nchw, params):
    """Pure-JAX f32 reference (mirrors the PyTorch forward semantics)."""
    B = x_nchw.shape[0]
    x = x_nchw.reshape(B, -1)
    h = jax.nn.gelu(x @ params["w1"] + params["b1"], approximate=True)
    feat = h @ params["w2"] + params["b2"]
    norm = jnp.maximum(jnp.linalg.norm(feat, axis=-1, keepdims=True), 1e-12)
    return (feat / norm) @ params["wc"] + params["bc"]


if __name__ == "__main__":
    # Small shapes: batch=2, channels=4, spatial=16x16, hidden=128, embed=64, classes=16
    B, C, H, W = 2, 4, 16, 16
    HID, EMB, NCLS = 128, 64, 16

    key = jax.random.PRNGKey(0)
    kx, kp = jax.random.split(key)
    x = jax.random.normal(kx, (B, C, H, W), jnp.float32)
    params = init_params(kp, C * H * W, HID, EMB, NCLS)

    logits = image_classifier_forward(x, params)
    logits = jax.block_until_ready(logits)

    ref = _reference_forward(x, params)
    assert logits.shape == (B, NCLS)
    # bf16 matmul operands vs f32 reference -> loosened tolerance.
    assert jnp.allclose(logits, ref, atol=5e-2, rtol=5e-2), "mismatch vs reference"

    print("KERNEL_OK")
</pallas_src>

<mosaic_0001>
module attributes {stable_mosaic.version = 11 : i64} {
  func.func @_classifier_kernel(%arg0: i32, %arg1: i32, %arg2: memref<8x1024xf32, #tpu.memory_space<vmem>>, %arg3: memref<1024x128xbf16, #tpu.memory_space<vmem>>, %arg4: memref<1x128xf32, #tpu.memory_space<vmem>>, %arg5: memref<128x128xbf16, #tpu.memory_space<vmem>>, %arg6: memref<1x128xf32, #tpu.memory_space<vmem>>, %arg7: memref<128x128xbf16, #tpu.memory_space<vmem>>, %arg8: memref<1x128xf32, #tpu.memory_space<vmem>>, %arg9: memref<8x128xf32, #tpu.memory_space<vmem>>, %arg10: memref<8x128xf32, #tpu.memory_space<vmem>>) attributes {dimension_semantics = [#tpu.dimension_semantics<parallel>, #tpu.dimension_semantics<arbitrary>], iteration_bounds = array<i64: 1, 1>, scalar_prefetch = 0 : i64, scratch_operands = 1 : i64, tpu.core_type = #tpu.core_type<tc>, window_params = [{transform_indices = @transform_0, window_bounds = array<i64: 8, 1024>}, {transform_indices = @transform_1, window_bounds = array<i64: 1024, 128>}, {pipeline_mode = #tpu.pipeline_mode<synchronous>, transform_indices = @transform_2, window_bounds = array<i64: 1, 128>}, {pipeline_mode = #tpu.pipeline_mode<synchronous>, transform_indices = @transform_3, window_bounds = array<i64: 128, 128>}, {pipeline_mode = #tpu.pipeline_mode<synchronous>, transform_indices = @transform_4, window_bounds = array<i64: 1, 128>}, {pipeline_mode = #tpu.pipeline_mode<synchronous>, transform_indices = @transform_5, window_bounds = array<i64: 128, 128>}, {pipeline_mode = #tpu.pipeline_mode<synchronous>, transform_indices = @transform_6, window_bounds = array<i64: 1, 128>}, {transform_indices = @transform_7, window_bounds = array<i64: 8, 128>}]} {
    %c0_i32 = arith.constant 0 : i32
    %0 = arith.cmpi eq, %arg1, %c0_i32 : i32
    %1 = arith.extui %0 : i1 to i32
    %c0_i32_0 = arith.constant 0 : i32
    %2 = arith.cmpi ne, %1, %c0_i32_0 : i32
    scf.if %2 {
      %cst_10 = arith.constant 0.000000e+00 : f32
      %13 = vector.broadcast %cst_10 : f32 to vector<8x128xf32>
      %c0_11 = arith.constant 0 : index
      %c0_12 = arith.constant 0 : index
      %14 = vector.load %arg10[%c0_11, %c0_12] : memref<8x128xf32, #tpu.memory_space<vmem>>, vector<8x128xf32>
      tpu.vector_store %arg10[%c0_11, %c0_12], %13 {strides = array<i32>} : memref<8x128xf32, #tpu.memory_space<vmem>>, vector<8x128xf32>,
    } else {
    }
    %c0 = arith.constant 0 : index
    %c0_1 = arith.constant 0 : index
    %3 = vector.load %arg2[%c0, %c0_1] : memref<8x1024xf32, #tpu.memory_space<vmem>>, vector<8x1024xf32>
    %4 = arith.truncf %3 : vector<8x1024xf32> to vector<8x1024xbf16>
    %c0_2 = arith.constant 0 : index
    %c0_3 = arith.constant 0 : index
    %5 = vector.load %arg10[%c0_2, %c0_3] : memref<8x128xf32, #tpu.memory_space<vmem>>, vector<8x128xf32>
    %c0_4 = arith.constant 0 : index
    %c0_5 = arith.constant 0 : index
    %6 = vector.load %arg3[%c0_4, %c0_5] : memref<1024x128xbf16, #tpu.memory_space<vmem>>, vector<1024x128xbf16>
    %cst = arith.constant dense<0.000000e+00> : vector<8x128xf32>
    %7 = tpu.matmul %4, %6, %cst {dimension_numbers = #tpu.dot_dimension_numbers<[1], [0], [0], [1], [0, 0, 1, 1], [], []>} : vector<8x1024xbf16>, vector<1024x128xbf16>, vector<8x128xf32> -> vector<8x128xf32>
    %8 = arith.addf %5, %7 : vector<8x128xf32>
    %c0_6 = arith.constant 0 : index
    %c0_7 = arith.constant 0 : index
    %9 = vector.load %arg10[%c0_6, %c0_7] : memref<8x128xf32, #tpu.memory_space<vmem>>, vector<8x128xf32>
    tpu.vector_store %arg10[%c0_6, %c0_7], %8 {strides = array<i32>} : memref<8x128xf32, #tpu.memory_space<vmem>>, vector<8x128xf32>,
    %c0_i32_8 = arith.constant 0 : i32
    %10 = arith.cmpi eq, %arg1, %c0_i32_8 : i32
    %11 = arith.extui %10 : i1 to i32
    %c0_i32_9 = arith.constant 0 : i32
    %12 = arith.cmpi ne, %11, %c0_i32_9 : i32
    scf.if %12 {
      %c0_10 = arith.constant 0 : index
      %c0_11 = arith.constant 0 : index
      %13 = vector.load %arg10[%c0_10, %c0_11] : memref<8x128xf32, #tpu.memory_space<vmem>>, vector<8x128xf32>
      %c0_12 = arith.constant 0 : index
      %c0_13 = arith.constant 0 : index
      %14 = vector.load %arg4[%c0_12, %c0_13] : memref<1x128xf32, #tpu.memory_space<vmem>>, vector<1x128xf32>
      %15 = vector.broadcast %14 : vector<1x128xf32> to vector<8x128xf32>
      %16 = arith.addf %13, %15 : vector<8x128xf32>
      %17 = arith.mulf %16, %16 : vector<8x128xf32>
      %18 = arith.mulf %16, %17 : vector<8x128xf32>
      %cst_14 = arith.constant 4.471500e-02 : f32
      %19 = vector.broadcast %cst_14 : f32 to vector<8x128xf32>
      %20 = arith.mulf %19, %18 : vector<8x128xf32>
      %21 = arith.addf %16, %20 : vector<8x128xf32>
      %cst_15 = arith.constant 0.797884583 : f32
      %22 = vector.broadcast %cst_15 : f32 to vector<8x128xf32>
      %23 = arith.mulf %22, %21 : vector<8x128xf32>
      %24 = math.tanh %23 : vector<8x128xf32>
      %cst_16 = arith.constant 1.000000e+00 : f32
      %25 = vector.broadcast %cst_16 : f32 to vector<8x128xf32>
      %26 = arith.addf %25, %24 : vector<8x128xf32>
      %cst_17 = arith.constant 5.000000e-01 : f32
      %27 = vector.broadcast %cst_17 : f32 to vector<8x128xf32>
      %28 = arith.mulf %27, %26 : vector<8x128xf32>
      %29 = arith.mulf %16, %28 : vector<8x128xf32>
      %30 = arith.truncf %29 : vector<8x128xf32> to vector<8x128xbf16>
      %c0_18 = arith.constant 0 : index
      %c0_19 = arith.constant 0 : index
      %31 = vector.load %arg5[%c0_18, %c0_19] : memref<128x128xbf16, #tpu.memory_space<vmem>>, vector<128x128xbf16>
      %cst_20 = arith.constant dense<0.000000e+00> : vector<8x128xf32>
      %32 = tpu.matmul %30, %31, %cst_20 {dimension_numbers = #tpu.dot_dimension_numbers<[1], [0], [0], [1], [0, 0, 1, 1], [], []>} : vector<8x128xbf16>, vector<128x128xbf16>, vector<8x128xf32> -> vector<8x128xf32>
      %c0_21 = arith.constant 0 : index
      %c0_22 = arith.constant 0 : index
      %33 = vector.load %arg6[%c0_21, %c0_22] : memref<1x128xf32, #tpu.memory_space<vmem>>, vector<1x128xf32>
      %34 = vector.broadcast %33 : vector<1x128xf32> to vector<8x128xf32>
      %35 = arith.addf %32, %34 : vector<8x128xf32>
      %36 = arith.mulf %35, %35 : vector<8x128xf32>
      %cst_23 = arith.constant dense<0.000000e+00> : vector<8xf32>
      %37 = vector.multi_reduction <add>, %36, %cst_23 [1] : vector<8x128xf32> to vector<8xf32>
      %38 = vector.shape_cast %37 : vector<8xf32> to vector<8x1xf32>
      %cst_24 = arith.constant 1.000000e-24 : f32
      %39 = vector.broadcast %cst_24 : f32 to vector<8x1xf32>
      %40 = arith.maximumf %38, %39 : vector<8x1xf32>
      %41 = math.rsqrt %40 : vector<8x1xf32>
      %42 = vector.broadcast %41 : vector<8x1xf32> to vector<8x128xf32>
      %43 = arith.mulf %35, %42 : vector<8x128xf32>
      %44 = arith.truncf %43 : vector<8x128xf32> to vector<8x128xbf16>
      %c0_25 = arith.constant 0 : index
      %c0_26 = arith.constant 0 : index
      %45 = vector.load %arg7[%c0_25, %c0_26] : memref<128x128xbf16, #tpu.memory_space<vmem>>, vector<128x128xbf16>
      %cst_27 = arith.constant dense<0.000000e+00> : vector<8x128xf32>
      %46 = tpu.matmul %44, %45, %cst_27 {dimension_numbers = #tpu.dot_dimension_numbers<[1], [0], [0], [1], [0, 0, 1, 1], [], []>} : vector<8x128xbf16>, vector<128x128xbf16>, vector<8x128xf32> -> vector<8x128xf32>
      %c0_28 = arith.constant 0 : index
      %c0_29 = arith.constant 0 : index
      %47 = vector.load %arg8[%c0_28, %c0_29] : memref<1x128xf32, #tpu.memory_space<vmem>>, vector<1x128xf32>
      %48 = vector.broadcast %47 : vector<1x128xf32> to vector<8x128xf32>
      %49 = arith.addf %46, %48 : vector<8x128xf32>
      %c0_30 = arith.constant 0 : index
      %c0_31 = arith.constant 0 : index
      %50 = vector.load %arg9[%c0_30, %c0_31] : memref<8x128xf32, #tpu.memory_space<vmem>>, vector<8x128xf32>
      tpu.vector_store %arg9[%c0_30, %c0_31], %49 {strides = array<i32>} : memref<8x128xf32, #tpu.memory_space<vmem>>, vector<8x128xf32>,
    } else {
    }
    return
  }
  func.func @transform_0(%arg0: i32, %arg1: i32) -> (i32, i32) {
    %c0_i32 = arith.constant 0 : i32
    return %arg0, %arg1 : i32, i32
  }
  func.func @transform_1(%arg0: i32, %arg1: i32) -> (i32, i32) {
    %c0_i32 = arith.constant 0 : i32
    %c0_i32_0 = arith.constant 0 : i32
    return %arg1, %c0_i32 : i32, i32
  }
  func.func @transform_2(%arg0: i32, %arg1: i32) -> (i32, i32) {
    %c0_i32 = arith.constant 0 : i32
    %c0_i32_0 = arith.constant 0 : i32
    %c0_i32_1 = arith.constant 0 : i32
    return %c0_i32, %c0_i32_0 : i32, i32
  }
  func.func @transform_3(%arg0: i32, %arg1: i32) -> (i32, i32) {
    %c0_i32 = arith.constant 0 : i32
    %c0_i32_0 = arith.constant 0 : i32
    %c0_i32_1 = arith.constant 0 : i32
    return %c0_i32, %c0_i32_0 : i32, i32
  }
  func.func @transform_4(%arg0: i32, %arg1: i32) -> (i32, i32) {
    %c0_i32 = arith.constant 0 : i32
    %c0_i32_0 = arith.constant 0 : i32
    %c0_i32_1 = arith.constant 0 : i32
    return %c0_i32, %c0_i32_0 : i32, i32
  }
  func.func @transform_5(%arg0: i32, %arg1: i32) -> (i32, i32) {
    %c0_i32 = arith.constant 0 : i32
    %c0_i32_0 = arith.constant 0 : i32
    %c0_i32_1 = arith.constant 0 : i32
    return %c0_i32, %c0_i32_0 : i32, i32
  }
  func.func @transform_6(%arg0: i32, %arg1: i32) -> (i32, i32) {
    %c0_i32 = arith.constant 0 : i32
    %c0_i32_0 = arith.constant 0 : i32
    %c0_i32_1 = arith.constant 0 : i32
    return %c0_i32, %c0_i32_0 : i32, i32
  }
  func.func @transform_7(%arg0: i32, %arg1: i32) -> (i32, i32) {
    %c0_i32 = arith.constant 0 : i32
    %c0_i32_0 = arith.constant 0 : i32
    return %arg0, %c0_i32 : i32, i32
  }
}

</mosaic_0001>

<llo_original>
// kernel: image_classifier_forward.1
$region0: #{image_classifier_forward.1}
  #allocation0 [shape = 'u32[]', space=smem, size = 0x4, offset = 0x4, fixed_abs, tag = 'smem constant byte address 0x4 - core index']
  #allocation1 [shape = 'u32[144,128]{1,0:T(1,128)}', space=vmem, size = 0x12000, scoped, tag = 'internal scratch']
  #allocation2 [shape = 'f32[8,128]{1,0:T(8,128)}', space=vmem, size = 0x1000, scoped, tag = 'scratch operand']
  %s0 = inlined_call_operand.vmem [shape: f32[8,1024], index: 0, kind: input, shape index: {}]
  %s1 = inlined_call_operand.vmem [shape: bf16[1024,128], index: 1, kind: input, shape index: {}]
  %s2 = inlined_call_operand.vmem [shape: f32[1,128], index: 2, kind: input, shape index: {}]
  %s3 = inlined_call_operand.vmem [shape: bf16[128,128], index: 3, kind: input, shape index: {}]
  %s4 = inlined_call_operand.vmem [shape: f32[1,128], index: 4, kind: input, shape index: {}]
  %s5 = inlined_call_operand.vmem [shape: bf16[128,128], index: 5, kind: input, shape index: {}]
  %s6 = inlined_call_operand.vmem [shape: f32[1,128], index: 6, kind: input, shape index: {}]
  %s7 = inlined_call_operand.vmem [shape: f32[8,128], index: 7, kind: output, shape index: {}]
  %s8 = sld [smem:[#allocation0]]
  $region46: #{image_classifier_forward.1} parent=0
    _
  %s10 = ssub.s32 1, %s8
  %s11 = scalar_select 0, %s10, %s8
  // Predicated region
  $region2: #{image_classifier_forward.1} parent=0 // pred_check
    _
  $region3: #{image_classifier_forward.1} parent=0 // pred_check_branch
    %13 = sbr.rel (0) target = $region5
  $region4: #{image_classifier_forward.1} parent=0 // pred_region
    _
  $region5: #{image_classifier_forward.1} parent=0 // pred_fallthru
    _
  // Predicated region
  $region6: #{image_classifier_forward.1} parent=0 // pred_check
    _
  $region7: #{image_classifier_forward.1} parent=0 // pred_check_branch
    %15 = sbr.rel (0) target = $region9
  $region8: #{image_classifier_forward.1} parent=0 // pred_region
    _
  $region9: #{image_classifier_forward.1} parent=0 // pred_fallthru
    _
  // Predicated region
  $region10: #{image_classifier_forward.1} parent=0 // pred_check
    _
  $region11: #{image_classifier_forward.1} parent=0 // pred_check_branch
    %17 = sbr.rel (0) target = $region13
  $region12: #{image_classifier_forward.1} parent=0 // pred_region
    _
  $region13: #{image_classifier_forward.1} parent=0 // pred_fallthru
    _
  // Predicated region
  $region14: #{image_classifier_forward.1} parent=0 // pred_check
    _
  $region15: #{image_classifier_forward.1} parent=0 // pred_check_branch
    %19 = sbr.rel (0) target = $region17
  $region16: #{image_classifier_forward.1} parent=0 // pred_region
    _
  $region17: #{image_classifier_forward.1} parent=0 // pred_fallthru
    _
  // Predicated region
  $region18: #{image_classifier_forward.1} parent=0 // pred_check
    _
  $region19: #{image_classifier_forward.1} parent=0 // pred_check_branch
    %21 = sbr.rel (0) target = $region21
  $region20: #{image_classifier_forward.1} parent=0 // pred_region
    _
  $region21: #{image_classifier_forward.1} parent=0 // pred_fallthru
    _
  // Predicated region
  $region22: #{image_classifier_forward.1} parent=0 // pred_check
    _
  $region23: #{image_classifier_forward.1} parent=0 // pred_check_branch
    %23 = sbr.rel (0) target = $region25
  $region24: #{image_classifier_forward.1} parent=0 // pred_region
    _
  $region25: #{image_classifier_forward.1} parent=0 // pred_fallthru
    _
  // Predicated region
  $region26: #{image_classifier_forward.1} parent=0 // pred_check
    _
  $region27: #{image_classifier_forward.1} parent=0 // pred_check_branch
    %25 = sbr.rel (0) target = $region29
  $region28: #{image_classifier_forward.1} parent=0 // pred_region
    _
  $region29: #{image_classifier_forward.1} parent=0 // pred_fallthru
    _
  %p27 = scmp.eq.s32.totalorder 0, 0
  // Predicated region
  $region30: #{image_classifier_forward.1} parent=0 // pred_check
    %p28 = pneg %p27
  $region31: #{image_classifier_forward.1} parent=0 // pred_check_branch
    %30 = sbr.rel (%p28) target = $region33
  $region32: #{image_classifier_forward.1} parent=0 // pred_region
    %31 = vst [vmem:[#allocation2] sm:$0xff] 0.0
  $region33: #{image_classifier_forward.1} parent=0 // pred_fallthru
    _
  %v32 = vld [vmem:[%s0] sm:$0xff]
  %v33 = vld [vmem:[%s0 + $0x8] sm:$0xff]
  %v34 = vld [vmem:[%s0 + $0x10] sm:$0xff]
  %v35 = vld [vmem:[%s0 + $0x18] sm:$0xff]
  %v36 = vld [vmem:[%s0 + $0x20] sm:$0xff]
  %v37 = vld [vmem:[%s0 + $0x28] sm:$0xff]
  %v38 = vld [vmem:[%s0 + $0x30] sm:$0xff]
  %v39 = vld [vmem:[%s0 + $0x38] sm:$0xff]
  %v40 = vpack.c.bf16 %v32, %v32
  %v41 = vpack.c.bf16 %v33, %v33
  %v42 = vpack.c.bf16 %v34, %v34
  %v43 = vpack.c.bf16 %v35, %v35
  %v44 = vpack.c.bf16 %v36, %v36
  %v45 = vpack.c.bf16 %v37, %v37
  %v46 = vpack.c.bf16 %v38, %v38
  %v47 = vpack.c.bf16 %v39, %v39
  %v48 = vld [vmem:[#allocation2] sm:$0xff]
  %v49 = vld [vmem:[%s1] sm:$0xf]
  %v50 = vld [vmem:[%s1 + $0x4] sm:$0xf]
  %v51 = vld [vmem:[%s1 + $0x8] sm:$0xf]
  %v52 = vld [vmem:[%s1 + $0xc] sm:$0xf]
  %v53 = vld [vmem:[%s1 + $0x10] sm:$0xf]
  %v54 = vld [vmem:[%s1 + $0x14] sm:$0xf]
  %v55 = vld [vmem:[%s1 + $0x18] sm:$0xf]
  %v56 = vld [vmem:[%s1 + $0x1c] sm:$0xf]
  %v57 = vld [vmem:[%s1 + $0x20] sm:$0xf]
  %v58 = vld [vmem:[%s1 + $0x24] sm:$0xf]
  %v59 = vld [vmem:[%s1 + $0x28] sm:$0xf]
  %v60 = vld [vmem:[%s1 + $0x2c] sm:$0xf]
  %v61 = vld [vmem:[%s1 + $0x30] sm:$0xf]
  %v62 = vld [vmem:[%s1 + $0x34] sm:$0xf]
  %v63 = vld [vmem:[%s1 + $0x38] sm:$0xf]
  %v64 = vld [vmem:[%s1 + $0x3c] sm:$0xf]
  %v65 = vld [vmem:[%s1 + $0x40] sm:$0xf]
  %v66 = vld [vmem:[%s1 + $0x44] sm:$0xf]
  %v67 = vld [vmem:[%s1 + $0x48] sm:$0xf]
  %v68 = vld [vmem:[%s1 + $0x4c] sm:$0xf]
  %v69 = vld [vmem:[%s1 + $0x50] sm:$0xf]
  %v70 = vld [vmem:[%s1 + $0x54] sm:$0xf]
  %v71 = vld [vmem:[%s1 + $0x58] sm:$0xf]
  %v72 = vld [vmem:[%s1 + $0x5c] sm:$0xf]
  %v73 = vld [vmem:[%s1 + $0x60] sm:$0xf]
  %v74 = vld [vmem:[%s1 + $0x64] sm:$0xf]
  %v75 = vld [vmem:[%s1 + $0x68] sm:$0xf]
  %v76 = vld [vmem:[%s1 + $0x6c] sm:$0xf]
  %v77 = vld [vmem:[%s1 + $0x70] sm:$0xf]
  %v78 = vld [vmem:[%s1 + $0x74] sm:$0xf]
  %v79 = vld [vmem:[%s1 + $0x78] sm:$0xf]
  %v80 = vld [vmem:[%s1 + $0x7c] sm:$0xf]
  %v81 = vld [vmem:[%s1 + $0x80] sm:$0xf]
  %v82 = vld [vmem:[%s1 + $0x84] sm:$0xf]
  %v83 = vld [vmem:[%s1 + $0x88] sm:$0xf]
  %v84 = vld [vmem:[%s1 + $0x8c] sm:$0xf]
  %v85 = vld [vmem:[%s1 + $0x90] sm:$0xf]
  %v86 = vld [vmem:[%s1 + $0x94] sm:$0xf]
  %v87 = vld [vmem:[%s1 + $0x98] sm:$0xf]
  %v88 = vld [vmem:[%s1 + $0x9c] sm:$0xf]
  %v89 = vld [vmem:[%s1 + $0xa0] sm:$0xf]
  %v90 = vld [vmem:[%s1 + $0xa4] sm:$0xf]
  %v91 = vld [vmem:[%s1 + $0xa8] sm:$0xf]
  %v92 = vld [vmem:[%s1 + $0xac] sm:$0xf]
  %v93 = vld [vmem:[%s1 + $0xb0] sm:$0xf]
  %v94 = vld [vmem:[%s1 + $0xb4] sm:$0xf]
  %v95 = vld [vmem:[%s1 + $0xb8] sm:$0xf]
  %v96 = vld [vmem:[%s1 + $0xbc] sm:$0xf]
  %v97 = vld [vmem:[%s1 + $0xc0] sm:$0xf]
  %v98 = vld [vmem:[%s1 + $0xc4] sm:$0xf]
  %v99 = vld [vmem:[%s1 + $0xc8] sm:$0xf]
  %v100 = vld [vmem:[%s1 + $0xcc] sm:$0xf]
  %v101 = vld [vmem:[%s1 + $0xd0] sm:$0xf]
  %v102 = vld [vmem:[%s1 + $0xd4] sm:$0xf]
  %v103 = vld [vmem:[%s1 + $0xd8] sm:$0xf]
  %v104 = vld [vmem:[%s1 + $0xdc] sm:$0xf]
  %v105 = vld [vmem:[%s1 + $0xe0] sm:$0xf]
  %v106 = vld [vmem:[%s1 + $0xe4] sm:$0xf]
  %v107 = vld [vmem:[%s1 + $0xe8] sm:$0xf]
  %v108 = vld [vmem:[%s1 + $0xec] sm:$0xf]
  %v109 = vld [vmem:[%s1 + $0xf0] sm:$0xf]
  %v110 = vld [vmem:[%s1 + $0xf4] sm:$0xf]
  %v111 = vld [vmem:[%s1 + $0xf8] sm:$0xf]
  %v112 = vld [vmem:[%s1 + $0xfc] sm:$0xf]
  %v113 = vld [vmem:[%s1 + $0x100] sm:$0xf]
  %v114 = vld [vmem:[%s1 + $0x104] sm:$0xf]
  %v115 = vld [vmem:[%s1 + $0x108] sm:$0xf]
  %v116 = vld [vmem:[%s1 + $0x10c] sm:$0xf]
  %v117 = vld [vmem:[%s1 + $0x110] sm:$0xf]
  %v118 = vld [vmem:[%s1 + $0x114] sm:$0xf]
  %v119 = vld [vmem:[%s1 + $0x118] sm:$0xf]
  %v120 = vld [vmem:[%s1 + $0x11c] sm:$0xf]
  %v121 = vld [vmem:[%s1 + $0x120] sm:$0xf]
  %v122 = vld [vmem:[%s1 + $0x124] sm:$0xf]
  %v123 = vld [vmem:[%s1 + $0x128] sm:$0xf]
  %v124 = vld [vmem:[%s1 + $0x12c] sm:$0xf]
  %v125 = vld [vmem:[%s1 + $0x130] sm:$0xf]
  %v126 = vld [vmem:[%s1 + $0x134] sm:$0xf]
  %v127 = vld [vmem:[%s1 + $0x138] sm:$0xf]
  %v128 = vld [vmem:[%s1 + $0x13c] sm:$0xf]
  %v129 = vld [vmem:[%s1 + $0x140] sm:$0xf]
  %v130 = vld [vmem:[%s1 + $0x144] sm:$0xf]
  %v131 = vld [vmem:[%s1 + $0x148] sm:$0xf]
  %v132 = vld [vmem:[%s1 + $0x14c] sm:$0xf]
  %v133 = vld [vmem:[%s1 + $0x150] sm:$0xf]
  %v134 = vld [vmem:[%s1 + $0x154] sm:$0xf]
  %v135 = vld [vmem:[%s1 + $0x158] sm:$0xf]
  %v136 = vld [vmem:[%s1 + $0x15c] sm:$0xf]
  %v137 = vld [vmem:[%s1 + $0x160] sm:$0xf]
  %v138 = vld [vmem:[%s1 + $0x164] sm:$0xf]
  %v139 = vld [vmem:[%s1 + $0x168] sm:$0xf]
  %v140 = vld [vmem:[%s1 + $0x16c] sm:$0xf]
  %v141 = vld [vmem:[%s1 + $0x170] sm:$0xf]
  %v142 = vld [vmem:[%s1 + $0x174] sm:$0xf]
  %v143 = vld [vmem:[%s1 + $0x178] sm:$0xf]
  %v144 = vld [vmem:[%s1 + $0x17c] sm:$0xf]
  %v145 = vld [vmem:[%s1 + $0x180] sm:$0xf]
  %v146 = vld [vmem:[%s1 + $0x184] sm:$0xf]
  %v147 = vld [vmem:[%s1 + $0x188] sm:$0xf]
  %v148 = vld [vmem:[%s1 + $0x18c] sm:$0xf]
  %v149 = vld [vmem:[%s1 + $0x190] sm:$0xf]
  %v150 = vld [vmem:[%s1 + $0x194] sm:$0xf]
  %v151 = vld [vmem:[%s1 + $0x198] sm:$0xf]
  %v152 = vld [vmem:[%s1 + $0x19c] sm:$0xf]
  %v153 = vld [vmem:[%s1 + $0x1a0] sm:$0xf]
  %v154 = vld [vmem:[%s1 + $0x1a4] sm:$0xf]
  %v155 = vld [vmem:[%s1 + $0x1a8] sm:$0xf]
  %v156 = vld [vmem:[%s1 + $0x1ac] sm:$0xf]
  %v157 = vld [vmem:[%s1 + $0x1b0] sm:$0xf]
  %v158 = vld [vmem:[%s1 + $0x1b4] sm:$0xf]
  %v159 = vld [vmem:[%s1 + $0x1b8] sm:$0xf]
  %v160 = vld [vmem:[%s1 + $0x1bc] sm:$0xf]
  %v161 = vld [vmem:[%s1 + $0x1c0] sm:$0xf]
  %v162 = vld [vmem:[%s1 + $0x1c4] sm:$0xf]
  %v163 = vld [vmem:[%s1 + $0x1c8] sm:$0xf]
  %v164 = vld [vmem:[%s1 + $0x1cc] sm:$0xf]
  %v165 = vld [vmem:[%s1 + $0x1d0] sm:$0xf]
  %v166 = vld [vmem:[%s1 + $0x1d4] sm:$0xf]
  %v167 = vld [vmem:[%s1 + $0x1d8] sm:$0xf]
  %v168 = vld [vmem:[%s1 + $0x1dc] sm:$0xf]
  %v169 = vld [vmem:[%s1 + $0x1e0] sm:$0xf]
  %v170 = vld [vmem:[%s1 + $0x1e4] sm:$0xf]
  %v171 = vld [vmem:[%s1 + $0x1e8] sm:$0xf]
  %v172 = vld [vmem:[%s1 + $0x1ec] sm:$0xf]
  %v173 = vld [vmem:[%s1 + $0x1f0] sm:$0xf]
  %v174 = vld [vmem:[%s1 + $0x1f4] sm:$0xf]
  %v175 = vld [vmem:[%s1 + $0x1f8] sm:$0xf]
  %v176 = vld [vmem:[%s1 + $0x1fc] sm:$0xf]
  %v305 = vunpack.c.l.b16 %v49
  %v306 = vunpack.c.l.b16 %v50
  %v307 = vunpack.c.l.b16 %v51
  %v308 = vunpack.c.l.b16 %v52
  %v309 = vunpack.c.l.b16 %v53
  %v310 = vunpack.c.l.b16 %v54
  %v311 = vunpack.c.l.b16 %v55
  %v312 = vunpack.c.l.b16 %v56
  %v313 = vunpack.c.l.b16 %v57
  %v314 = vunpack.c.l.b16 %v58
  %v315 = vunpack.c.l.b16 %v59
  %v316 = vunpack.c.l.b16 %v60
  %v317 = vunpack.c.l.b16 %v61
  %v318 = vunpack.c.l.b16 %v62
  %v319 = vunpack.c.l.b16 %v63
  %v320 = vunpack.c.l.b16 %v64
  %v321 = vunpack.c.l.b16 %v65
  %v322 = vunpack.c.l.b16 %v66
  %v323 = vunpack.c.l.b16 %v67
  %v324 = vunpack.c.l.b16 %v68
  %v325 = vunpack.c.l.b16 %v69
  %v326 = vunpack.c.l.b16 %v70
  %v327 = vunpack.c.l.b16 %v71
  %v328 = vunpack.c.l.b16 %v72
  %v329 = vunpack.c.l.b16 %v73
  %v330 = vunpack.c.l.b16 %v74
  %v331 = vunpack.c.l.b16 %v75
  %v332 = vunpack.c.l.b16 %v76
  %v333 = vunpack.c.l.b16 %v77
  %v334 = vunpack.c.l.b16 %v78
  %v335 = vunpack.c.l.b16 %v79
  %v336 = vunpack.c.l.b16 %v80
  %v337 = vunpack.c.l.b16 %v81
  %v338 = vunpack.c.l.b16 %v82
  %v339 = vunpack.c.l.b16 %v83
  %v340 = vunpack.c.l.b16 %v84
  %v341 = vunpack.c.l.b16 %v85
  %v342 = vunpack.c.l.b16 %v86
  %v343 = vunpack.c.l.b16 %v87
  %v344 = vunpack.c.l.b16 %v88
  %v345 = vunpack.c.l.b16 %v89
  %v346 = vunpack.c.l.b16 %v90
  %v347 = vunpack.c.l.b16 %v91
  %v348 = vunpack.c.l.b16 %v92
  %v349 = vunpack.c.l.b16 %v93
  %v350 = vunpack.c.l.b16 %v94
  %v351 = vunpack.c.l.b16 %v95
  %v352 = vunpack.c.l.b16 %v96
  %v353 = vunpack.c.l.b16 %v97
  %v354 = vunpack.c.l.b16 %v98
  %v355 = vunpack.c.l.b16 %v99
  %v356 = vunpack.c.l.b16 %v100
  %v357 = vunpack.c.l.b16 %v101
  %v358 = vunpack.c.l.b16 %v102
  %v359 = vunpack.c.l.b16 %v103
  %v360 = vunpack.c.l.b16 %v104
  %v361 = vunpack.c.l.b16 %v105
  %v362 = vunpack.c.l.b16 %v106
  %v363 = vunpack.c.l.b16 %v107
  %v364 = vunpack.c.l.b16 %v108
  %v365 = vunpack.c.l.b16 %v109
  %v366 = vunpack.c.l.b16 %v110
  %v367 = vunpack.c.l.b16 %v111
  %v368 = vunpack.c.l.b16 %v112
  %v369 = vunpack.c.l.b16 %v113
  %v370 = vunpack.c.l.b16 %v114
  %v371 = vunpack.c.l.b16 %v115
  %v372 = vunpack.c.l.b16 %v116
  %v373 = vunpack.c.l.b16 %v117
  %v374 = vunpack.c.l.b16 %v118
  %v375 = vunpack.c.l.b16 %v119
  %v376 = vunpack.c.l.b16 %v120
  %v377 = vunpack.c.l.b16 %v121
  %v378 = vunpack.c.l.b16 %v122
  %v379 = vunpack.c.l.b16 %v123
  %v380 = vunpack.c.l.b16 %v124
  %v381 = vunpack.c.l.b16 %v125
  %v382 = vunpack.c.l.b16 %v126
  %v383 = vunpack.c.l.b16 %v127
  %v384 = vunpack.c.l.b16 %v128
  %v385 = vunpack.c.l.b16 %v129
  %v386 = vunpack.c.l.b16 %v130
  %v387 = vunpack.c.l.b16 %v131
  %v388 = vunpack.c.l.b16 %v132
  %v389 = vunpack.c.l.b16 %v133
  %v390 = vunpack.c.l.b16 %v134
  %v391 = vunpack.c.l.b16 %v135
  %v392 = vunpack.c.l.b16 %v136
  %v393 = vunpack.c.l.b16 %v137
  %v394 = vunpack.c.l.b16 %v138
  %v395 = vunpack.c.l.b16 %v139
  %v396 = vunpack.c.l.b16 %v140
  %v397 = vunpack.c.l.b16 %v141
  %v398 = vunpack.c.l.b16 %v142
  %v399 = vunpack.c.l.b16 %v143
  %v400 = vunpack.c.l.b16 %v144
  %v401 = vunpack.c.l.b16 %v145
  %v402 = vunpack.c.l.b16 %v146
  %v403 = vunpack.c.l.b16 %v147
  %v404 = vunpack.c.l.b16 %v148
  %v405 = vunpack.c.l.b16 %v149
  %v406 = vunpack.c.l.b16 %v150
  %v407 = vunpack.c.l.b16 %v151
  %v408 = vunpack.c.l.b16 %v152
  %v409 = vunpack.c.l.b16 %v153
  %v410 = vunpack.c.l.b16 %v154
  %v411 = vunpack.c.l.b16 %v155
  %v412 = vunpack.c.l.b16 %v156
  %v413 = vunpack.c.l.b16 %v157
  %v414 = vunpack.c.l.b16 %v158
  %v415 = vunpack.c.l.b16 %v159
  %v416 = vunpack.c.l.b16 %v160
  %v417 = vunpack.c.l.b16 %v161
  %v418 = vunpack.c.l.b16 %v162
  %v419 = vunpack.c.l.b16 %v163
  %v420 = vunpack.c.l.b16 %v164
  %v421 = vunpack.c.l.b16 %v165
  %v422 = vunpack.c.l.b16 %v166
  %v423 = vunpack.c.l.b16 %v167
  %v424 = vunpack.c.l.b16 %v168
  %v425 = vunpack.c.l.b16 %v169
  %v426 = vunpack.c.l.b16 %v170
  %v427 = vunpack.c.l.b16 %v171
  %v428 = vunpack.c.l.b16 %v172
  %v429 = vunpack.c.l.b16 %v173
  %v430 = vunpack.c.l.b16 %v174
  %v431 = vunpack.c.l.b16 %v175
  %v432 = vunpack.c.l.b16 %v176
  %v433 = vpack.c.b16 %v306, %v305
  %v434 = vpack.c.b16 %v308, %v307
  %v435 = vpack.c.b16 %v310, %v309
  %v436 = vpack.c.b16 %v312, %v311
  %v437 = vpack.c.b16 %v314, %v313
  %v438 = vpack.c.b16 %v316, %v315
  %v439 = vpack.c.b16 %v318, %v317
  %v440 = vpack.c.b16 %v320, %v319
  %v441 = vpack.c.b16 %v322, %v321
  %v442 = vpack.c.b16 %v324, %v323
  %v443 = vpack.c.b16 %v326, %v325
  %v444 = vpack.c.b16 %v328, %v327
  %v445 = vpack.c.b16 %v330, %v329
  %v446 = vpack.c.b16 %v332, %v331
  %v447 = vpack.c.b16 %v334, %v333
  %v448 = vpack.c.b16 %v336, %v335
  %v449 = vpack.c.b16 %v338, %v337
  %v450 = vpack.c.b16 %v340, %v339
  %v451 = vpack.c.b16 %v342, %v341
  %v452 = vpack.c.b16 %v344, %v343
  %v453 = vpack.c.b16 %v346, %v345
  %v454 = vpack.c.b16 %v348, %v347
  %v455 = vpack.c.b16 %v350, %v349
  %v456 = vpack.c.b16 %v352, %v351
  %v457 = vpack.c.b16 %v354, %v353
  %v458 = vpack.c.b16 %v356, %v355
  %v459 = vpack.c.b16 %v358, %v357
  %v460 = vpack.c.b16 %v360, %v359
  %v461 = vpack.c.b16 %v362, %v361
  %v462 = vpack.c.b16 %v364, %v363
  %v463 = vpack.c.b16 %v366, %v365
  %v464 = vpack.c.b16 %v368, %v367
  %v465 = vpack.c.b16 %v370, %v369
  %v466 = vpack.c.b16 %v372, %v371
  %v467 = vpack.c.b16 %v374, %v373
  %v468 = vpack.c.b16 %v376, %v375
  %v469 = vpack.c.b16 %v378, %v377
  %v470 = vpack.c.b16 %v380, %v379
  %v471 = vpack.c.b16 %v382, %v381
  %v472 = vpack.c.b16 %v384, %v383
  %v473 = vpack.c.b16 %v386, %v385
  %v474 = vpack.c.b16 %v388, %v387
  %v475 = vpack.c.b16 %v390, %v389
  %v476 = vpack.c.b16 %v392, %v391
  %v477 = vpack.c.b16 %v394, %v393
  %v478 = vpack.c.b16 %v396, %v395
  %v479 = vpack.c.b16 %v398, %v397
  %v480 = vpack.c.b16 %v400, %v399
  %v481 = vpack.c.b16 %v402, %v401
  %v482 = vpack.c.b16 %v404, %v403
  %v483 = vpack.c.b16 %v406, %v405
  %v484 = vpack.c.b16 %v408, %v407
  %v485 = vpack.c.b16 %v410, %v409
  %v486 = vpack.c.b16 %v412, %v411
  %v487 = vpack.c.b16 %v414, %v413
  %v488 = vpack.c.b16 %v416, %v415
  %v489 = vpack.c.b16 %v418, %v417
  %v490 = vpack.c.b16 %v420, %v419
  %v491 = vpack.c.b16 %v422, %v421
  %v492 = vpack.c.b16 %v424, %v423
  %v493 = vpack.c.b16 %v426, %v425
  %v494 = vpack.c.b16 %v428, %v427
  %v495 = vpack.c.b16 %v430, %v429
  %v496 = vpack.c.b16 %v432, %v431
  %561 = vmatprep.subr.bf16.mxu0 0
  %562 = vmatpush1.bf16.msra.mxu0 %v433
  %563 = vmatprep.subr.bf16.mxu0 0
  %564 = vmatpush1.bf16.msra.mxu0 %v434
  %565 = vmatprep.subr.bf16.mxu0 0
  %566 = vmatpush1.bf16.msra.mxu0 %v435
  %567 = vmatprep.subr.bf16.mxu0 0
  %568 = vmatpush1.bf16.msra.mxu0 %v436
  %569 = vmatprep.subr.bf16.mxu0 0
  %570 = vmatpush1.bf16.msra.mxu0 %v437
  %571 = vmatprep.subr.bf16.mxu0 0
  %572 = vmatpush1.bf16.msra.mxu0 %v438
  %573 = vmatprep.subr.bf16.mxu0 0
  %574 = vmatpush1.bf16.msra.mxu0 %v439
  %575 = vmatprep.subr.bf16.mxu0 0
  %576 = vmatpush1.bf16.msra.mxu0 %v440
  %577 = vmatprep.subr.bf16.mxu0 0
  %578 = vmatpush1.bf16.msra.mxu0 %v441
  %579 = vmatprep.subr.bf16.mxu0 0
  %580 = vmatpush1.bf16.msra.mxu0 %v442
  %581 = vmatprep.subr.bf16.mxu0 0
  %582 = vmatpush1.bf16.msra.mxu0 %v443
  %583 = vmatprep.subr.bf16.mxu0 0
  %584 = vmatpush1.bf16.msra.mxu0 %v444
  %585 = vmatprep.subr.bf16.mxu0 0
  %586 = vmatpush1.bf16.msra.mxu0 %v445
  %587 = vmatprep.subr.bf16.mxu0 0
  %588 = vmatpush1.bf16.msra.mxu0 %v446
  %589 = vmatprep.subr.bf16.mxu0 0
  %590 = vmatpush1.bf16.msra.mxu0 %v447
  %591 = vmatprep.subr.bf16.mxu0 0
  %592 = vmatpush1.bf16.msra.mxu0 %v448
  %593 = vmatprep.mubr.bf16.mxu0 %v41
  %594 = vmatmul.mubr.bf16.gmra.mrb[0].mxu0 %v40
  %v595 = vpop.f32.mrb[0].mxu0
  %v596 = vadd.f32 0.0, %v595
  %v597 = vpop.f32.mrb[0].mxu0
  %v598 = vpop.f32.mrb[0].mxu0
  %v599 = vpop.f32.mrb[0].mxu0
  %600 = vdwg.mxu0
  %601 = vmatprep.subr.bf16.mxu0 0
  %602 = vmatpush1.bf16.msra.mxu0 %v449
  %603 = vmatprep.subr.bf16.mxu0 0
  %604 = vmatpush1.bf16.msra.mxu0 %v450
  %605 = vmatprep.subr.bf16.mxu0 0
  %606 = vmatpush1.bf16.msra.mxu0 %v451
  %607 = vmatprep.subr.bf16.mxu0 0
  %608 = vmatpush1.bf16.msra.mxu0 %v452
  %609 = vmatprep.subr.bf16.mxu0 0
  %610 = vmatpush1.bf16.msra.mxu0 %v453
  %611 = vmatprep.subr.bf16.mxu0 0
  %612 = vmatpush1.bf16.msra.mxu0 %v454
  %613 = vmatprep.subr.bf16.mxu0 0
  %614 = vmatpush1.bf16.msra.mxu0 %v455
  %615 = vmatprep.subr.bf16.mxu0 0
  %616 = vmatpush1.bf16.msra.mxu0 %v456
  %617 = vmatprep.subr.bf16.mxu0 0
  %618 = vmatpush1.bf16.msra.mxu0 %v457
  %619 = vmatprep.subr.bf16.mxu0 0
  %620 = vmatpush1.bf16.msra.mxu0 %v458
  %621 = vmatprep.subr.bf16.mxu0 0
  %622 = vmatpush1.bf16.msra.mxu0 %v459
  %623 = vmatprep.subr.bf16.mxu0 0
  %624 = vmatpush1.bf16.msra.mxu0 %v460
  %625 = vmatprep.subr.bf16.mxu0 0
  %626 = vmatpush1.bf16.msra.mxu0 %v461
  %627 = vmatprep.subr.bf16.mxu0 0
  %628 = vmatpush1.bf16.msra.mxu0 %v462
  %629 = vmatprep.subr.bf16.mxu0 0
  %630 = vmatpush1.bf16.msra.mxu0 %v463
  %631 = vmatprep.subr.bf16.mxu0 0
  %632 = vmatpush1.bf16.msra.mxu0 %v464
  %633 = vmatprep.mubr.bf16.mxu0 %v43
  %634 = vmatmul.mubr.bf16.gmra.mrb[0].mxu0 %v42
  %v635 = vpop.f32.mrb[0].mxu0
  %v636 = vadd.f32 %v596, %v635
  %v637 = vpop.f32.mrb[0].mxu0
  %v638 = vpop.f32.mrb[0].mxu0
  %v639 = vpop.f32.mrb[0].mxu0
  %640 = vdwg.mxu0
  %641 = vmatprep.subr.bf16.mxu0 0
  %642 = vmatpush1.bf16.msra.mxu0 %v465
  %643 = vmatprep.subr.bf16.mxu0 0
  %644 = vmatpush1.bf16.msra.mxu0 %v466
  %645 = vmatprep.subr.bf16.mxu0 0
  %646 = vmatpush1.bf16.msra.mxu0 %v467
  %647 = vmatprep.subr.bf16.mxu0 0
  %648 = vmatpush1.bf16.msra.mxu0 %v468
  %649 = vmatprep.subr.bf16.mxu0 0
  %650 = vmatpush1.bf16.msra.mxu0 %v469
  %651 = vmatprep.subr.bf16.mxu0 0
  %652 = vmatpush1.bf16.msra.mxu0 %v470
  %653 = vmatprep.subr.bf16.mxu0 0
  %654 = vmatpush1.bf16.msra.mxu0 %v471
  %655 = vmatprep.subr.bf16.mxu0 0
  %656 = vmatpush1.bf16.msra.mxu0 %v472
  %657 = vmatprep.subr.bf16.mxu0 0
  %658 = vmatpush1.bf16.msra.mxu0 %v473
  %659 = vmatprep.subr.bf16.mxu0 0
  %660 = vmatpush1.bf16.msra.mxu0 %v474
  %661 = vmatprep.subr.bf16.mxu0 0
  %662 = vmatpush1.bf16.msra.mxu0 %v475
  %663 = vmatprep.subr.bf16.mxu0 0
  %664 = vmatpush1.bf16.msra.mxu0 %v476
  %665 = vmatprep.subr.bf16.mxu0 0
  %666 = vmatpush1.bf16.msra.mxu0 %v477
  %667 = vmatprep.subr.bf16.mxu0 0
  %668 = vmatpush1.bf16.msra.mxu0 %v478
  %669 = vmatprep.subr.bf16.mxu0 0
  %670 = vmatpush1.bf16.msra.mxu0 %v479
  %671 = vmatprep.subr.bf16.mxu0 0
  %672 = vmatpush1.bf16.msra.mxu0 %v480
  %673 = vmatprep.mubr.bf16.mxu0 %v45
  %674 = vmatmul.mubr.bf16.gmra.mrb[0].mxu0 %v44
  %v675 = vpop.f32.mrb[0].mxu0
  %v676 = vadd.f32 %v636, %v675
  %v677 = vpop.f32.mrb[0].mxu0
  %v678 = vpop.f32.mrb[0].mxu0
  %v679 = vpop.f32.mrb[0].mxu0
  %680 = vdwg.mxu0
  %681 = vmatprep.subr.bf16.mxu0 0
  %682 = vmatpush1.bf16.msra.mxu0 %v481
  %683 = vmatprep.subr.bf16.mxu0 0
  %684 = vmatpush1.bf16.msra.mxu0 %v482
  %685 = vmatprep.subr.bf16.mxu0 0
  %686 = vmatpush1.bf16.msra.mxu0 %v483
  %687 = vmatprep.subr.bf16.mxu0 0
  %688 = vmatpush1.bf16.msra.mxu0 %v484
  %689 = vmatprep.subr.bf16.mxu0 0
  %690 = vmatpush1.bf16.msra.mxu0 %v485
  %691 = vmatprep.subr.bf16.mxu0 0
  %692 = vmatpush1.bf16.msra.mxu0 %v486
  %693 = vmatprep.subr.bf16.mxu0 0
  %694 = vmatpush1.bf16.msra.mxu0 %v487
  %695 = vmatprep.subr.bf16.mxu0 0
  %696 = vmatpush1.bf16.msra.mxu0 %v488
  %697 = vmatprep.subr.bf16.mxu0 0
  %698 = vmatpush1.bf16.msra.mxu0 %v489
  %699 = vmatprep.subr.bf16.mxu0 0
  %700 = vmatpush1.bf16.msra.mxu0 %v490
  %701 = vmatprep.subr.bf16.mxu0 0
  %702 = vmatpush1.bf16.msra.mxu0 %v491
  %703 = vmatprep.subr.bf16.mxu0 0
  %704 = vmatpush1.bf16.msra.mxu0 %v492
  %705 = vmatprep.subr.bf16.mxu0 0
  %706 = vmatpush1.bf16.msra.mxu0 %v493
  %707 = vmatprep.subr.bf16.mxu0 0
  %708 = vmatpush1.bf16.msra.mxu0 %v494
  %709 = vmatprep.subr.bf16.mxu0 0
  %710 = vmatpush1.bf16.msra.mxu0 %v495
  %711 = vmatprep.subr.bf16.mxu0 0
  %712 = vmatpush1.bf16.msra.mxu0 %v496
  %713 = vmatprep.mubr.bf16.mxu0 %v47
  %714 = vmatmul.mubr.bf16.gmra.mrb[0].mxu0 %v46
  %v715 = vpop.f32.mrb[0].mxu0
  %v716 = vadd.f32 %v676, %v715
  %v717 = vpop.f32.mrb[0].mxu0
  %v718 = vpop.f32.mrb[0].mxu0
  %v719 = vpop.f32.mrb[0].mxu0
  %720 = vdwg.mxu0
  %v721 = vadd.f32 %v48, %v716
  %722 = vst [vmem:[#allocation2] sm:$0xff] %v721
  // Predicated region
  $region34: #{image_classifier_forward.1} parent=0 // pred_check
    %p723 = pneg %p27
  $region35: #{image_classifier_forward.1} parent=0 // pred_check_branch
    %725 = sbr.rel (%p723) target = $region37
  $region36: #{image_classifier_forward.1} parent=0 // pred_region
    %v726 = vld [vmem:[#allocation2] sm:$0xff]
    %v727 = vld [vmem:[%s2] sm:$0x1]
    %v729 = vlaneseq
    %v730 = vshrl.u32 %v729, 7
    %v731 = vsub.s32 0, %v730
    %v732 = vrot.slane %v727, %v731
    %v734 = vadd.f32 %v726, %v732
    %v735 = vmul.f32 %v734, %v734
    %v736 = vmul.f32 %v734, %v735
    %v737 = vmul.f32 %v736, 0.044715
    %v738 = vadd.f32 %v734, %v737
    %v739 = vmul.f32 %v738, 0.7978846
    %v740 = vtanh.pop %v739
    %v741 = vadd.f32 %v740, 1.0
    %v742 = vmul.f32 %v741, 0.5
    %v743 = vmul.f32 %v734, %v742
    %v744 = vpack.c.bf16 %v743, %v743
    %v745 = vld [vmem:[%s3] sm:$0xf]
    %v746 = vld [vmem:[%s3 + $0x4] sm:$0xf]
    %v747 = vld [vmem:[%s3 + $0x8] sm:$0xf]
    %v748 = vld [vmem:[%s3 + $0xc] sm:$0xf]
    %v749 = vld [vmem:[%s3 + $0x10] sm:$0xf]
    %v750 = vld [vmem:[%s3 + $0x14] sm:$0xf]
    %v751 = vld [vmem:[%s3 + $0x18] sm:$0xf]
    %v752 = vld [vmem:[%s3 + $0x1c] sm:$0xf]
    %v753 = vld [vmem:[%s3 + $0x20] sm:$0xf]
    %v754 = vld [vmem:[%s3 + $0x24] sm:$0xf]
    %v755 = vld [vmem:[%s3 + $0x28] sm:$0xf]
    %v756 = vld [vmem:[%s3 + $0x2c] sm:$0xf]
    %v757 = vld [vmem:[%s3 + $0x30] sm:$0xf]
    %v758 = vld [vmem:[%s3 + $0x34] sm:$0xf]
    %v759 = vld [vmem:[%s3 + $0x38] sm:$0xf]
    %v760 = vld [vmem:[%s3 + $0x3c] sm:$0xf]
    %v761 = vld [vmem:[%s4] sm:$0x1]
    %v763 = vlaneseq
    %v764 = vshrl.u32 %v763, 7
    %v765 = vsub.s32 0, %v764
    %v766 = vrot.slane %v761, %v765
    %v784 = vunpack.c.l.b16 %v745
    %v785 = vunpack.c.l.b16 %v746
    %v786 = vunpack.c.l.b16 %v747
    %v787 = vunpack.c.l.b16 %v748
    %v788 = vunpack.c.l.b16 %v749
    %v789 = vunpack.c.l.b16 %v750
    %v790 = vunpack.c.l.b16 %v751
    %v791 = vunpack.c.l.b16 %v752
    %v792 = vunpack.c.l.b16 %v753
    %v793 = vunpack.c.l.b16 %v754
    %v794 = vunpack.c.l.b16 %v755
    %v795 = vunpack.c.l.b16 %v756
    %v796 = vunpack.c.l.b16 %v757
    %v797 = vunpack.c.l.b16 %v758
    %v798 = vunpack.c.l.b16 %v759
    %v799 = vunpack.c.l.b16 %v760
    %v800 = vpack.c.b16 %v785, %v784
    %v801 = vpack.c.b16 %v787, %v786
    %v802 = vpack.c.b16 %v789, %v788
    %v803 = vpack.c.b16 %v791, %v790
    %v804 = vpack.c.b16 %v793, %v792
    %v805 = vpack.c.b16 %v795, %v794
    %v806 = vpack.c.b16 %v797, %v796
    %v807 = vpack.c.b16 %v799, %v798
    %816 = vmatprep.subr.bf16.mxu0 0
    %817 = vmatpush1.bf16.msra.mxu0 %v800
    %818 = vmatprep.subr.bf16.mxu0 0
    %819 = vmatpush1.bf16.msra.mxu0 %v801
    %820 = vmatprep.subr.bf16.mxu0 0
    %821 = vmatpush1.bf16.msra.mxu0 %v802
    %822 = vmatprep.subr.bf16.mxu0 0
    %823 = vmatpush1.bf16.msra.mxu0 %v803
    %824 = vmatprep.subr.bf16.mxu0 0
    %825 = vmatpush1.bf16.msra.mxu0 %v804
    %826 = vmatprep.subr.bf16.mxu0 0
    %827 = vmatpush1.bf16.msra.mxu0 %v805
    %828 = vmatprep.subr.bf16.mxu0 0
    %829 = vmatpush1.bf16.msra.mxu0 %v806
    %830 = vmatprep.subr.bf16.mxu0 0
    %831 = vmatpush1.bf16.msra.mxu0 %v807
    %832 = vmatprep.subr.bf16.mxu0 0
    %833 = vmatpush1.bf16.msra.mxu0 0
    %834 = vmatprep.subr.bf16.mxu0 0
    %835 = vmatpush1.bf16.msra.mxu0 0
    %836 = vmatprep.subr.bf16.mxu0 0
    %837 = vmatpush1.bf16.msra.mxu0 0
    %838 = vmatprep.subr.bf16.mxu0 0
    %839 = vmatpush1.bf16.msra.mxu0 0
    %840 = vmatprep.subr.bf16.mxu0 0
    %841 = vmatpush1.bf16.msra.mxu0 0
    %842 = vmatprep.subr.bf16.mxu0 0
    %843 = vmatpush1.bf16.msra.mxu0 0
    %844 = vmatprep.subr.bf16.mxu0 0
    %845 = vmatpush1.bf16.msra.mxu0 0
    %846 = vmatprep.subr.bf16.mxu0 0
    %847 = vmatpush1.bf16.msra.mxu0 0
    %848 = vmatprep.mubr.bf16.mxu0 0
    %849 = vmatmul.mubr.bf16.gmra.mrb[0].mxu0 %v744
    %v850 = vpop.f32.mrb[0].mxu0
    %v851 = vadd.f32 %v766, %v850
    %v852 = vpop.f32.mrb[0].mxu0
    %v853 = vpop.f32.mrb[0].mxu0
    %v854 = vpop.f32.mrb[0].mxu0
    %855 = vdwg.mxu0
    %v856 = vmul.f32 %v851, %v851
    %857 = vadd.xlane.f32.xlu0 %v856
    %v858 = vpop.xlane.xlu0 %857
    %v859 = vmax.f32 %v858, 1e-24
    %v860 = vrsqrt.pop %v859
    %v861 = vmul.f32 %v851, %v860
    %v862 = vpack.c.bf16 %v861, %v861
    %v863 = vld [vmem:[%s5] sm:$0xf]
    %v864 = vld [vmem:[%s5 + $0x4] sm:$0xf]
    %v865 = vld [vmem:[%s5 + $0x8] sm:$0xf]
    %v866 = vld [vmem:[%s5 + $0xc] sm:$0xf]
    %v867 = vld [vmem:[%s5 + $0x10] sm:$0xf]
    %v868 = vld [vmem:[%s5 + $0x14] sm:$0xf]
    %v869 = vld [vmem:[%s5 + $0x18] sm:$0xf]
    %v870 = vld [vmem:[%s5 + $0x1c] sm:$0xf]
    %v871 = vld [vmem:[%s5 + $0x20] sm:$0xf]
    %v872 = vld [vmem:[%s5 + $0x24] sm:$0xf]
    %v873 = vld [vmem:[%s5 + $0x28] sm:$0xf]
    %v874 = vld [vmem:[%s5 + $0x2c] sm:$0xf]
    %v875 = vld [vmem:[%s5 + $0x30] sm:$0xf]
    %v876 = vld [vmem:[%s5 + $0x34] sm:$0xf]
    %v877 = vld [vmem:[%s5 + $0x38] sm:$0xf]
    %v878 = vld [vmem:[%s5 + $0x3c] sm:$0xf]
    %v879 = vld [vmem:[%s6] sm:$0x1]
    %v881 = vlaneseq
    %v882 = vshrl.u32 %v881, 7
    %v883 = vsub.s32 0, %v882
    %v884 = vrot.slane %v879, %v883
    %v902 = vunpack.c.l.b16 %v863
    %v903 = vunpack.c.l.b16 %v864
    %v904 = vunpack.c.l.b16 %v865
    %v905 = vunpack.c.l.b16 %v866
    %v906 = vunpack.c.l.b16 %v867
    %v907 = vunpack.c.l.b16 %v868
    %v908 = vunpack.c.l.b16 %v869
    %v909 = vunpack.c.l.b16 %v870
    %v910 = vunpack.c.l.b16 %v871
    %v911 = vunpack.c.l.b16 %v872
    %v912 = vunpack.c.l.b16 %v873
    %v913 = vunpack.c.l.b16 %v874
    %v914 = vunpack.c.l.b16 %v875
    %v915 = vunpack.c.l.b16 %v876
    %v916 = vunpack.c.l.b16 %v877
    %v917 = vunpack.c.l.b16 %v878
    %v918 = vpack.c.b16 %v903, %v902
    %v919 = vpack.c.b16 %v905, %v904
    %v920 = vpack.c.b16 %v907, %v906
    %v921 = vpack.c.b16 %v909, %v908
    %v922 = vpack.c.b16 %v911, %v910
    %v923 = vpack.c.b16 %v913, %v912
    %v924 = vpack.c.b16 %v915, %v914
    %v925 = vpack.c.b16 %v917, %v916
    %934 = vmatprep.subr.bf16.mxu0 0
    %935 = vmatpush1.bf16.msra.mxu0 %v918
    %936 = vmatprep.subr.bf16.mxu0 0
    %937 = vmatpush1.bf16.msra.mxu0 %v919
    %938 = vmatprep.subr.bf16.mxu0 0
    %939 = vmatpush1.bf16.msra.mxu0 %v920
    %940 = vmatprep.subr.bf16.mxu0 0
    %941 = vmatpush1.bf16.msra.mxu0 %v921
    %942 = vmatprep.subr.bf16.mxu0 0
    %943 = vmatpush1.bf16.msra.mxu0 %v922
    %944 = vmatprep.subr.bf16.mxu0 0
    %945 = vmatpush1.bf16.msra.mxu0 %v923
    %946 = vmatprep.subr.bf16.mxu0 0
    %947 = vmatpush1.bf16.msra.mxu0 %v924
    %948 = vmatprep.subr.bf16.mxu0 0
    %949 = vmatpush1.bf16.msra.mxu0 %v925
    %950 = vmatprep.subr.bf16.mxu0 0
    %951 = vmatpush1.bf16.msra.mxu0 0
    %952 = vmatprep.subr.bf16.mxu0 0
    %953 = vmatpush1.bf16.msra.mxu0 0
    %954 = vmatprep.subr.bf16.mxu0 0
    %955 = vmatpush1.bf16.msra.mxu0 0
    %956 = vmatprep.subr.bf16.mxu0 0
    %957 = vmatpush1.bf16.msra.mxu0 0
    %958 = vmatprep.subr.bf16.mxu0 0
    %959 = vmatpush1.bf16.msra.mxu0 0
    %960 = vmatprep.subr.bf16.mxu0 0
    %961 = vmatpush1.bf16.msra.mxu0 0
    %962 = vmatprep.subr.bf16.mxu0 0
    %963 = vmatpush1.bf16.msra.mxu0 0
    %964 = vmatprep.subr.bf16.mxu0 0
    %965 = vmatpush1.bf16.msra.mxu0 0
    %966 = vmatprep.mubr.bf16.mxu0 0
    %967 = vmatmul.mubr.bf16.gmra.mrb[0].mxu0 %v862
    %v968 = vpop.f32.mrb[0].mxu0
    %v969 = vadd.f32 %v884, %v968
    %v970 = vpop.f32.mrb[0].mxu0
    %v971 = vpop.f32.mrb[0].mxu0
    %v972 = vpop.f32.mrb[0].mxu0
    %973 = vdwg.mxu0
    %974 = vst [vmem:[%s7] sm:$0xff] %v969
  $region37: #{image_classifier_forward.1} parent=0 // pred_fallthru
    _
  // Predicated region
  $region38: #{image_classifier_forward.1} parent=0 // pred_check
    _
  $region39: #{image_classifier_forward.1} parent=0 // pred_check_branch
    %976 = sbr.rel (0) target = $region41
  $region40: #{image_classifier_forward.1} parent=0 // pred_region
    _
  $region41: #{image_classifier_forward.1} parent=0 // pred_fallthru
    _
  // Predicated region
  $region42: #{image_classifier_forward.1} parent=0 // pred_check
    _
  $region43: #{image_classifier_forward.1} parent=0 // pred_check_branch
    %978 = sbr.rel (0) target = $region45
  $region44: #{image_classifier_forward.1} parent=0 // pred_region
    _
  $region45: #{image_classifier_forward.1} parent=0 // pred_fallthru
    _

</llo_original>
